<compile_context>
chip_gen: v6e
topology: v6e:2x2x1
jax: 0.10.0
libtpu: 0.0.40
codegen_flags: <defaults>
</compile_context>

<pallas_src>
import jax
import jax.numpy as jnp
import numpy as np
from jax.experimental import pallas as pl
from jax.experimental.pallas import tpu as pltpu

_LANES = 128  # vreg lane width


def _cdiv(a, b):
    return -(-a // b)


def _round_up(a, b):
    return _cdiv(a, b) * b


def _sublane_multiple(dtype):
    """Sublane tiling granularity for the given element width."""
    itemsize = jnp.dtype(dtype).itemsize
    if itemsize >= 4:
        return 8
    if itemsize == 2:
        return 16
    return 32


# ---------------------------------------------------------------------------
# Kernel: R = (lambda4*P - rho2)/lambda4  ==  P - rho2 * (1/lambda4)
# lambda4 is a scalar in SMEM; P/rho2/out are lane-dense (rows, 128) tiles in
# VMEM, streamed in their native dtype and upcast to f32 in-register.
# ---------------------------------------------------------------------------
def _update_r_kernel(lam_ref, p_ref, r_ref, o_ref):
    inv_lam = 1.0 / lam_ref[0]                    # one scalar reciprocal / step
    p = p_ref[...].astype(jnp.float32)
    r = r_ref[...].astype(jnp.float32)
    o_ref[...] = (p - r * inv_lam).astype(o_ref.dtype)


def update_R(P, lambda4, rho2, *, max_block_rows=2048, min_pallas_elems=1 << 18):
    """Pallas implementation of update_R.forward (any P/rho2 shape, scalar lambda4).

    max_block_rows=2048 -> 1 MiB/operand/step (f32), safe on v5e/v6e/v7x scoped
    VMEM defaults. On v7x you may raise it to 4096-8192 (set vmem_limit_bytes
    if pushing past ~12 MiB/operand double-buffered).
    """
    assert P.shape == rho2.shape, "P and rho2 must have the same shape"
    orig_shape = P.shape
    dtype = P.dtype
    total = int(np.prod(orig_shape)) if orig_shape else 1

    # ---- small-input fallback: launch + reshapes dominate at us scale -------
    if total < min_pallas_elems:
        lam = jnp.asarray(lambda4, dtype=jnp.result_type(dtype, jnp.float32))
        out = (lam * P.astype(lam.dtype) - rho2.astype(lam.dtype)) / lam
        return out.astype(dtype)

    sub = _sublane_multiple(dtype)
    rows = _cdiv(total, _LANES)

    # Row-strip size: as large as allowed, aligned to the dtype's sublane tile.
    block_rows = min(int(max_block_rows), _round_up(rows, sub))
    block_rows = _round_up(block_rows, sub)

    # Only a *tail* pad when the flat size is not a multiple of 128; reshape of
    # a contiguous array to (rows, 128) is free.  Ragged final grid blocks are
    # handled by Pallas masking (no full-array pad / output slice).
    pad_tail = rows * _LANES - total
    p_flat = P.reshape(-1)
    r_flat = rho2.reshape(-1)
    if pad_tail:
        p_flat = jnp.pad(p_flat, (0, pad_tail))
        r_flat = jnp.pad(r_flat, (0, pad_tail))
    p2 = p_flat.reshape(rows, _LANES)
    r2 = r_flat.reshape(rows, _LANES)
    lam = jnp.asarray(lambda4, jnp.float32).reshape((1,))

    grid = (pl.cdiv(rows, block_rows),)
    itemsize = jnp.dtype(dtype).itemsize
    cost = pl.CostEstimate(flops=2 * total, transcendentals=0,
                           bytes_accessed=3 * total * itemsize)

    out = pl.pallas_call(
        _update_r_kernel,
        out_shape=jax.ShapeDtypeStruct((rows, _LANES), dtype),
        grid=grid,
        in_specs=[
            pl.BlockSpec(memory_space=pltpu.MemorySpace.SMEM),          # lambda4
            pl.BlockSpec((block_rows, _LANES), lambda i: (i, 0)),       # P
            pl.BlockSpec((block_rows, _LANES), lambda i: (i, 0)),       # rho2
        ],
        out_specs=pl.BlockSpec((block_rows, _LANES), lambda i: (i, 0)),
        compiler_params=pltpu.CompilerParams(
            dimension_semantics=("parallel",)),
        cost_estimate=cost,
    )(lam, p2, r2)

    if pad_tail:
        return out.reshape(-1)[:total].reshape(orig_shape)
    return out.reshape(orig_shape)


# ---------------------------------------------------------------------------
# Pure-JAX reference (matches the PyTorch formula exactly).
# ---------------------------------------------------------------------------
def update_R_ref(P, lambda4, rho2):
    return (lambda4 * P - rho2) / lambda4


if __name__ == "__main__":
    key = jax.random.PRNGKey(0)
    kP, kr = jax.random.split(key, 2)

    lambda4 = jnp.float32(0.8)

    # --- small NCHW image tensors, consistent with the module's usage -------
    N, C, H, W = 2, 4, 16, 16
    P = jax.random.normal(kP, (N, C, H, W), jnp.float32)
    rho2 = jax.random.normal(kr, (N, C, H, W), jnp.float32)
    ref = update_R_ref(P, lambda4, rho2)

    # 1) default dispatch (tiny input -> fused XLA fallback path)
    out_fb = jax.block_until_ready(update_R(P, lambda4, rho2))
    assert out_fb.shape == (N, C, H, W)
    np.testing.assert_allclose(np.asarray(out_fb), np.asarray(ref),
                               rtol=1e-5, atol=1e-5)

    # 2) force the Pallas kernel path on the same small input
    out_k = jax.block_until_ready(update_R(P, lambda4, rho2, min_pallas_elems=0))
    np.testing.assert_allclose(np.asarray(out_k), np.asarray(ref),
                               rtol=1e-5, atol=1e-5)

    # 3) larger input exercising the default multi-step kernel path
    Nb, Cb, Hb, Wb = 4, 8, 128, 128          # 524288 elems -> rows=4096, grid=(2,)
    P2 = jax.random.normal(kP, (Nb, Cb, Hb, Wb), jnp.float32)
    rho2_2 = jax.random.normal(kr, (Nb, Cb, Hb, Wb), jnp.float32)
    out2 = jax.block_until_ready(update_R(P2, lambda4, rho2_2))
    ref2 = update_R_ref(P2, lambda4, rho2_2)
    np.testing.assert_allclose(np.asarray(out2), np.asarray(ref2),
                               rtol=1e-5, atol=1e-5)

    # 4) bf16 stays bf16 end-to-end (native-dtype streaming, f32 in-register)
    Pb = P.astype(jnp.bfloat16)
    rb = rho2.astype(jnp.bfloat16)
    out_bf = jax.block_until_ready(update_R(Pb, lambda4, rb, min_pallas_elems=0))
    assert out_bf.dtype == jnp.bfloat16
    ref_bf = (jnp.float32(lambda4) * Pb.astype(jnp.float32)
              - rb.astype(jnp.float32)) / jnp.float32(lambda4)
    np.testing.assert_allclose(np.asarray(out_bf.astype(jnp.float32)),
                               np.asarray(ref_bf), rtol=2e-2, atol=2e-2)

    print("KERNEL_OK")
</pallas_src>

<mosaic_0001>
module attributes {stable_mosaic.version = 11 : i64} {
  func.func @_update_r_kernel(%arg0: i32, %arg1: memref<1xf32, #tpu.memory_space<smem>>, %arg2: memref<16x128xf32, #tpu.memory_space<vmem>>, %arg3: memref<16x128xf32, #tpu.memory_space<vmem>>, %arg4: memref<16x128xf32, #tpu.memory_space<vmem>>) attributes {dimension_semantics = [#tpu.dimension_semantics<parallel>], iteration_bounds = array<i64: 1>, scalar_prefetch = 0 : i64, scratch_operands = 0 : i64, tpu.core_type = #tpu.core_type<tc>, window_params = [{transform_indices = @transform_0, window_bounds = array<i64: 1>}, {transform_indices = @transform_1, window_bounds = array<i64: 16, 128>}, {transform_indices = @transform_2, window_bounds = array<i64: 16, 128>}, {transform_indices = @transform_3, window_bounds = array<i64: 16, 128>}]} {
    %c0 = arith.constant 0 : index
    %0 = memref.load %arg1[%c0] : memref<1xf32, #tpu.memory_space<smem>>
    %cst = arith.constant 1.000000e+00 : f32
    %1 = arith.divf %cst, %0 : f32
    %c0_0 = arith.constant 0 : index
    %c0_1 = arith.constant 0 : index
    %2 = vector.load %arg2[%c0_0, %c0_1] : memref<16x128xf32, #tpu.memory_space<vmem>>, vector<16x128xf32>
    %c0_2 = arith.constant 0 : index
    %c0_3 = arith.constant 0 : index
    %3 = vector.load %arg3[%c0_2, %c0_3] : memref<16x128xf32, #tpu.memory_space<vmem>>, vector<16x128xf32>
    %4 = vector.broadcast %1 : f32 to vector<16x128xf32>
    %5 = arith.mulf %3, %4 : vector<16x128xf32>
    %6 = arith.subf %2, %5 : vector<16x128xf32>
    %c0_4 = arith.constant 0 : index
    %c0_5 = arith.constant 0 : index
    %7 = vector.load %arg4[%c0_4, %c0_5] : memref<16x128xf32, #tpu.memory_space<vmem>>, vector<16x128xf32>
    tpu.vector_store %arg4[%c0_4, %c0_5], %6 {strides = array<i32>} : memref<16x128xf32, #tpu.memory_space<vmem>>, vector<16x128xf32>,
    return
  }
  func.func @transform_0(%arg0: i32) -> i32 {
    %c0_i32 = arith.constant 0 : i32
    %c0_i32_0 = arith.constant 0 : i32
    return %c0_i32 : i32
  }
  func.func @transform_1(%arg0: i32) -> (i32, i32) {
    %c0_i32 = arith.constant 0 : i32
    %c0_i32_0 = arith.constant 0 : i32
    return %arg0, %c0_i32 : i32, i32
  }
  func.func @transform_2(%arg0: i32) -> (i32, i32) {
    %c0_i32 = arith.constant 0 : i32
    %c0_i32_0 = arith.constant 0 : i32
    return %arg0, %c0_i32 : i32, i32
  }
  func.func @transform_3(%arg0: i32) -> (i32, i32) {
    %c0_i32 = arith.constant 0 : i32
    %c0_i32_0 = arith.constant 0 : i32
    return %arg0, %c0_i32 : i32, i32
  }
}

</mosaic_0001>

<llo_original>
// kernel: tpu_custom_call.1
$region0: #{tpu_custom_call.1}
  #allocation0 [shape = 'u32[]', space=smem, size = 0x4, offset = 0x4, fixed_abs, tag = 'smem constant byte address 0x4 - core index']
  #allocation1 [shape = 'u32[144,128]{1,0:T(1,128)}', space=vmem, size = 0x12000, scoped, tag = 'internal scratch']
  #allocation2 [shape = 'f32[1]{0:T(128)S(6)}', space=smem, size = 0x200, scoped, tag = 'scoped memory for tpu_custom_call.1']
  %s0 = inlined_call_operand.<no memory space> [shape: f32[1], index: 0, kind: input, shape index: {}]
  %s1 = inlined_call_operand.hbm [shape: f32[16,128], index: 1, kind: input, shape index: {}]
  %s2 = inlined_call_operand.hbm [shape: f32[16,128], index: 2, kind: input, shape index: {}]
  %s3 = inlined_call_operand.hbm [shape: f32[16,128], index: 3, kind: output, shape index: {}]
  %s4 = sld [smem:[#allocation0]]
  $region30: #{tpu_custom_call.1} parent=0
    _
  %s6 = ssub.s32 1, %s4
  %s7 = scalar_select 0, %s6, %s4
  %8 = sst [smem:[#allocation2]] %s0
  $region1: #{tpu_custom_call.1} parent=0
    #allocation3 [shape = 'u8[8192]{0}', space=vmem, size = 0x2000, scoped, tag = 'input window, operand 1, single buffered']
    #allocation4 [shape = 's32[1]{0}', space=sflag, size = 0x4, scoped, tag = 'scoped memory for tpu_custom_call.1']
    #allocation5 [shape = 's32[1]{0}', space=sflag, size = 0x4, scoped, tag = 'scoped memory for tpu_custom_call.1']
    #allocation6 [shape = 'u8[8192]{0}', space=vmem, size = 0x2000, scoped, tag = 'input window, operand 2, single buffered']
    #allocation7 [shape = 's32[1]{0}', space=sflag, size = 0x4, scoped, tag = 'scoped memory for tpu_custom_call.1']
    #allocation8 [shape = 'u8[8192]{0}', space=vmem, size = 0x2000, scoped, tag = 'output window, operand 0, single buffered']
    %9 = vsyncpa [#allocation4], 0
    %10 = vsyncpa [#allocation7], 0
    %11 = vsyncpa [#allocation5], 0
    // Predicated region
    $region2: #{tpu_custom_call.1} parent=1 // pred_check
      _
    $region3: #{tpu_custom_call.1} parent=1 // pred_check_branch
      %13 = sbr.rel (0) target = $region5
    $region4: #{tpu_custom_call.1} parent=1 // pred_region
      _
    $region5: #{tpu_custom_call.1} parent=1 // pred_fallthru
      _
    // Predicated region
    $region6: #{tpu_custom_call.1} parent=1 // pred_check
      _
    $region7: #{tpu_custom_call.1} parent=1 // pred_check_branch
      %15 = sbr.rel (0) target = $region9
    $region8: #{tpu_custom_call.1} parent=1 // pred_region
      %s17 = ssub.s32 256, 256
      %18 = vsyncadd [#allocation4], %s17
      %s19 = sshll.u32 [#allocation3], 4
      %s20 = int_to_ptr.vmem [resolvable:$true] %s19
      %25 = dma.hbm_to_vmem [thread:$0]  %s1, 256, %s20, [#allocation4], 128, 128, 8
    $region9: #{tpu_custom_call.1} parent=1 // pred_fallthru
      _
    // Predicated region
    $region10: #{tpu_custom_call.1} parent=1 // pred_check
      _
    $region11: #{tpu_custom_call.1} parent=1 // pred_check_branch
      %27 = sbr.rel (0) target = $region13
    $region12: #{tpu_custom_call.1} parent=1 // pred_region
      %s29 = ssub.s32 256, 256
      %30 = vsyncadd [#allocation7], %s29
      %s31 = sshll.u32 [#allocation6], 4
      %s32 = int_to_ptr.vmem [resolvable:$true] %s31
      %37 = dma.hbm_to_vmem [thread:$0]  %s2, 256, %s32, [#allocation7], 128, 128, 8
    $region13: #{tpu_custom_call.1} parent=1 // pred_fallthru
      _
    // Predicated region
    $region14: #{tpu_custom_call.1} parent=1 // pred_check
      _
    $region15: #{tpu_custom_call.1} parent=1 // pred_check_branch
      %39 = sbr.rel (0) target = $region17
    $region16: #{tpu_custom_call.1} parent=1 // pred_region
      %40 = dma.done [#allocation4], 256
    $region17: #{tpu_custom_call.1} parent=1 // pred_fallthru
      _
    // Predicated region
    $region18: #{tpu_custom_call.1} parent=1 // pred_check
      _
    $region19: #{tpu_custom_call.1} parent=1 // pred_check_branch
      %42 = sbr.rel (0) target = $region21
    $region20: #{tpu_custom_call.1} parent=1 // pred_region
      %43 = dma.done [#allocation7], 256
    $region21: #{tpu_custom_call.1} parent=1 // pred_fallthru
      _
    %s44 = sld [smem:[#allocation2]]
    %v45 = vstv %s44
    %v46 = vrcp.pop %v45
    %s47 = vtos %v46
    %v48 = vld [vmem:[#allocation3] sm:$0xff]
    %v49 = vld [vmem:[#allocation3 + $0x8] sm:$0xff]
    %v50 = vld [vmem:[#allocation6] sm:$0xff]
    %v51 = vld [vmem:[#allocation6 + $0x8] sm:$0xff]
    %v52 = vstv %s47
    %v53 = vmul.f32 %v50, %v52
    %v54 = vmul.f32 %v51, %v52
    %v55 = vsub.f32 %v48, %v53
    %v56 = vsub.f32 %v49, %v54
    %57 = vst [vmem:[#allocation8] sm:$0xff] %v55
    %58 = vst [vmem:[#allocation8 + $0x8] sm:$0xff] %v56
    // Predicated region
    $region22: #{tpu_custom_call.1} parent=1 // pred_check
      _
    $region23: #{tpu_custom_call.1} parent=1 // pred_check_branch
      %60 = sbr.rel (0) target = $region25
    $region24: #{tpu_custom_call.1} parent=1 // pred_region
      %s62 = ssub.s32 256, 256
      %63 = vsyncadd [#allocation5], %s62
      %s64 = sshll.u32 [#allocation8], 4
      %s65 = int_to_ptr.vmem [resolvable:$true] %s64
      %70 = dma.vmem_to_hbm [thread:$0]  %s65, 256, %s3, [#allocation5], 128, 128, 8
    $region25: #{tpu_custom_call.1} parent=1 // pred_fallthru
      _
    // Predicated region
    $region26: #{tpu_custom_call.1} parent=1 // pred_check
      _
    $region27: #{tpu_custom_call.1} parent=1 // pred_check_branch
      %72 = sbr.rel (0) target = $region29
    $region28: #{tpu_custom_call.1} parent=1 // pred_region
      %73 = dma.done [#allocation5], 256
    $region29: #{tpu_custom_call.1} parent=1 // pred_fallthru
      _
    %74 = vsyncpa [#allocation4], 1
    %75 = vsyncpa [#allocation7], 1
    %76 = vsyncpa [#allocation5], 1

</llo_original>
